<compile_context>
chip_gen: v6e
topology: v6e:2x2x1
jax: 0.10.0
libtpu: 0.0.40
codegen_flags: <defaults>
</compile_context>

<pallas_src>
import functools

import numpy as np
import jax
import jax.numpy as jnp
from jax.experimental import pallas as pl
from jax.experimental.pallas import tpu as pltpu


def _round_up(a, b):
    return (a + b - 1) // b * b


def _attn_res2x2_kernel(x_ref, w1_ref, b1_ref, w21_ref, b21_ref,
                        w22_ref, b22_ref, wh_ref, bh_ref, out_ref, *, D, M):
    cdt = w1_ref.dtype                      # MXU streaming dtype (f32 or bf16)
    x = x_ref[...]

    # ---- Stage 1: one fused matmul for all four branches' first layer.
    # W1 column layout: [g1_a | g2_a | d1_a | d2_a | g1_b | g2_b | d1_b | d2_b]
    s1 = jnp.dot(x, w1_ref[...], preferred_element_type=jnp.float32) + b1_ref[...]
    half = 2 * D + 2 * M
    gated = jnp.tanh(s1[:, :half]) * jax.nn.sigmoid(s1[:, half:])
    # gated columns: [A1 (D) | A3 (D) | h1 (M) | h2 (M)]
    h1 = gated[:, 2 * D:2 * D + M].astype(cdt)
    h2 = gated[:, 2 * D + M:].astype(cdt)

    # ---- Stage 2: the two "double" branches; tanh|sigmoid pair fused per branch.
    s21 = jnp.dot(h1, w21_ref[...], preferred_element_type=jnp.float32) + b21_ref[...]
    A2 = jnp.tanh(s21[:, :D]) * jax.nn.sigmoid(s21[:, D:])
    s22 = jnp.dot(h2, w22_ref[...], preferred_element_type=jnp.float32) + b22_ref[...]
    A4 = jnp.tanh(s22[:, :D]) * jax.nn.sigmoid(s22[:, D:])

    # ---- Head: Parallel_Linear + sum over branches as a single matmul.
    # Head columns = [A1 | A3 | A2 | A4]; wh rows are packed in that branch
    # order on the host, and bh is the branch-summed bias.
    head = jnp.concatenate([gated[:, :2 * D], A2, A4], axis=-1).astype(cdt)
    out = jnp.dot(head, wh_ref[...], preferred_element_type=jnp.float32) + bh_ref[...]
    out_ref[...] = out.astype(out_ref.dtype)


def attn_net_res2x2(x, params, *, tm=1024, stream_dtype=None):
    """Pallas implementation of Attn_Net_Res2x2.forward. Returns (A, x)."""
    N, L = x.shape
    D = params["g1_wa"].shape[1]
    M = params["d1_wa"].shape[1]
    n_classes = params["pw"].shape[2]
    if stream_dtype is None:
        stream_dtype = x.dtype
    f32 = jnp.float32

    # ---- host-side weight packing (26 params -> 8 fused arrays) ----
    w1 = jnp.concatenate(
        [params["g1_wa"], params["g2_wa"], params["d1_wa"], params["d2_wa"],
         params["g1_wb"], params["g2_wb"], params["d1_wb"], params["d2_wb"]],
        axis=1).astype(stream_dtype)
    b1 = jnp.concatenate(
        [params["g1_ba"], params["g2_ba"], params["d1_ba"], params["d2_ba"],
         params["g1_bb"], params["g2_bb"], params["d1_bb"], params["d2_bb"]],
        axis=1).astype(f32)
    w21 = jnp.concatenate([params["d1_wc"], params["d1_wd"]], axis=1).astype(stream_dtype)
    b21 = jnp.concatenate([params["d1_bc"], params["d1_bd"]], axis=1).astype(f32)
    w22 = jnp.concatenate([params["d2_wc"], params["d2_wd"]], axis=1).astype(stream_dtype)
    b22 = jnp.concatenate([params["d2_bc"], params["d2_bd"]], axis=1).astype(f32)
    pw = params["pw"]
    # Head rows ordered (A1, A3, A2, A4) to match the kernel's concat order.
    wh = jnp.concatenate([pw[0], pw[2], pw[1], pw[3]], axis=0).astype(stream_dtype)
    bh = jnp.sum(params["pb"], axis=0, keepdims=True).astype(f32)   # pre-summed bias

    # ---- row tiling: big blocks, pad N so every row is computed ----
    # (tm should be a multiple of 256 for v6e/v7x, 128 for v5e, when N allows;
    #  round to 16 so f32 and bf16 sublane tiling are both satisfied.)
    tm = _round_up(max(1, min(tm, N)), 16)
    N_pad = _round_up(N, tm)
    x_s = x.astype(stream_dtype)
    if N_pad != N:
        x_s = jnp.pad(x_s, ((0, N_pad - N), (0, 0)))

    weights = [w1, b1, w21, b21, w22, b22, wh, bh]

    def full_spec(a):
        return pl.BlockSpec(a.shape, lambda i: (0, 0))

    in_specs = [pl.BlockSpec((tm, L), lambda i: (i, 0))]
    in_specs += [full_spec(a) for a in weights]

    dsz = jnp.dtype(stream_dtype).itemsize
    flops = 2 * N_pad * (L * (4 * D + 4 * M) + 2 * M * 2 * D + 4 * D * n_classes)
    transcendentals = N_pad * (8 * D + 4 * M)
    bytes_accessed = (
        N_pad * L * dsz
        + sum(int(np.prod(a.shape)) * jnp.dtype(a.dtype).itemsize for a in weights)
        + N_pad * n_classes * 4)

    out = pl.pallas_call(
        functools.partial(_attn_res2x2_kernel, D=D, M=M),
        out_shape=jax.ShapeDtypeStruct((N_pad, n_classes), jnp.float32),
        grid_spec=pltpu.PrefetchScalarGridSpec(
            num_scalar_prefetch=0,
            grid=(N_pad // tm,),
            in_specs=in_specs,
            out_specs=pl.BlockSpec((tm, n_classes), lambda i: (i, 0)),
        ),
        compiler_params=pltpu.CompilerParams(
            dimension_semantics=("parallel",),
            vmem_limit_bytes=32 * 1024 * 1024,
        ),
        cost_estimate=pl.CostEstimate(
            flops=flops,
            transcendentals=transcendentals,
            bytes_accessed=bytes_accessed),
    )(x_s, *weights)

    if N_pad != N:
        out = out[:N]
    return out, x


def init_params(key, L, D, M, n_classes):
    """Deterministic, PyTorch-style (uniform +-1/sqrt(fan_in)) init."""
    keys = iter(jax.random.split(key, 32))

    def lin(fan_in, fan_out):
        kw, kb = next(keys), next(keys)
        bound = 1.0 / np.sqrt(fan_in)
        w = jax.random.uniform(kw, (fan_in, fan_out), jnp.float32, -bound, bound)
        b = jax.random.uniform(kb, (1, fan_out), jnp.float32, -bound, bound)
        return w, b

    p = {}
    # Attn_Net (gated #1)
    p["g1_wa"], p["g1_ba"] = lin(L, D)
    p["g1_wb"], p["g1_bb"] = lin(L, D)
    # Attn_Net_Double (#1)
    p["d1_wa"], p["d1_ba"] = lin(L, M)
    p["d1_wb"], p["d1_bb"] = lin(L, M)
    p["d1_wc"], p["d1_bc"] = lin(M, D)
    p["d1_wd"], p["d1_bd"] = lin(M, D)
    # Attn_Net_1 (gated #2)
    p["g2_wa"], p["g2_ba"] = lin(L, D)
    p["g2_wb"], p["g2_bb"] = lin(L, D)
    # Attn_Net_Double_1 (#2)
    p["d2_wa"], p["d2_ba"] = lin(L, M)
    p["d2_wb"], p["d2_bb"] = lin(L, M)
    p["d2_wc"], p["d2_bc"] = lin(M, D)
    p["d2_wd"], p["d2_bd"] = lin(M, D)
    # Parallel_Linear: weight stored as (4, D, n_classes), bias (4, n_classes)
    kw, kb = next(keys), next(keys)
    bound = 1.0 / np.sqrt(D)
    p["pw"] = jax.random.uniform(kw, (4, D, n_classes), jnp.float32, -bound, bound)
    p["pb"] = jax.random.uniform(kb, (4, n_classes), jnp.float32, -bound, bound)
    return p


def reference(x, p):
    """Pure-JAX reference mirroring the PyTorch forward."""
    def gate(h, wa, ba, wb, bb):
        return jnp.tanh(h @ wa + ba) * jax.nn.sigmoid(h @ wb + bb)

    A1 = gate(x, p["g1_wa"], p["g1_ba"], p["g1_wb"], p["g1_bb"])
    A2 = gate(gate(x, p["d1_wa"], p["d1_ba"], p["d1_wb"], p["d1_bb"]),
              p["d1_wc"], p["d1_bc"], p["d1_wd"], p["d1_bd"])
    A3 = gate(x, p["g2_wa"], p["g2_ba"], p["g2_wb"], p["g2_bb"])
    A4 = gate(gate(x, p["d2_wa"], p["d2_ba"], p["d2_wb"], p["d2_bb"]),
              p["d2_wc"], p["d2_bc"], p["d2_wd"], p["d2_bd"])
    A = jnp.stack([A1, A2, A3, A4], axis=1)                  # (N, 4, D)
    out = jnp.einsum("kci,cio->kco", A, p["pw"]) + p["pb"][None]
    return out.sum(axis=1), x                                # (N, n_classes)


if __name__ == "__main__":
    # Small shapes consistent with the module (L -> M -> D -> n_classes).
    # N=19 deliberately not a multiple of the tile to exercise the padded grid.
    N, L, D, M, n_classes = 19, 64, 32, 48, 1
    key = jax.random.PRNGKey(0)
    kx, kp = jax.random.split(key)
    x = jax.random.normal(kx, (N, L), jnp.float32)
    params = init_params(kp, L, D, M, n_classes)

    A_ref, _ = reference(x, params)

    # f32 streaming path.
    A_out, x_out = attn_net_res2x2(x, params)
    A_out = jax.block_until_ready(A_out)
    x_out = jax.block_until_ready(x_out)
    np.testing.assert_allclose(np.asarray(A_out), np.asarray(A_ref),
                               rtol=2e-3, atol=2e-3)
    assert A_out.shape == (N, n_classes)
    assert x_out.shape == (N, L)

    # bf16 streaming path (halves HBM traffic on v6e/v7x; f32 accumulation).
    A_bf16, _ = attn_net_res2x2(x, params, stream_dtype=jnp.bfloat16)
    A_bf16 = jax.block_until_ready(A_bf16)
    np.testing.assert_allclose(np.asarray(A_bf16), np.asarray(A_ref),
                               rtol=5e-2, atol=5e-2)

    print("KERNEL_OK")
</pallas_src>

<mosaic_0001>
module attributes {stable_mosaic.version = 11 : i64} {
  func.func @_attn_res2x2_kernel(%arg0: i32, %arg1: memref<32x64xf32, #tpu.memory_space<vmem>>, %arg2: memref<64x320xf32, #tpu.memory_space<vmem>>, %arg3: memref<1x320xf32, #tpu.memory_space<vmem>>, %arg4: memref<48x64xf32, #tpu.memory_space<vmem>>, %arg5: memref<1x64xf32, #tpu.memory_space<vmem>>, %arg6: memref<48x64xf32, #tpu.memory_space<vmem>>, %arg7: memref<1x64xf32, #tpu.memory_space<vmem>>, %arg8: memref<128x1xf32, #tpu.memory_space<vmem>>, %arg9: memref<1x1xf32, #tpu.memory_space<vmem>>, %arg10: memref<32x1xf32, #tpu.memory_space<vmem>>) attributes {dimension_semantics = [#tpu.dimension_semantics<parallel>], iteration_bounds = array<i64: 1>, scalar_prefetch = 0 : i64, scratch_operands = 0 : i64, tpu.core_type = #tpu.core_type<tc>, window_params = [{transform_indices = @transform_0, window_bounds = array<i64: 32, 64>}, {pipeline_mode = #tpu.pipeline_mode<synchronous>, transform_indices = @transform_1, window_bounds = array<i64: 64, 320>}, {pipeline_mode = #tpu.pipeline_mode<synchronous>, transform_indices = @transform_2, window_bounds = array<i64: 1, 320>}, {pipeline_mode = #tpu.pipeline_mode<synchronous>, transform_indices = @transform_3, window_bounds = array<i64: 48, 64>}, {pipeline_mode = #tpu.pipeline_mode<synchronous>, transform_indices = @transform_4, window_bounds = array<i64: 1, 64>}, {pipeline_mode = #tpu.pipeline_mode<synchronous>, transform_indices = @transform_5, window_bounds = array<i64: 48, 64>}, {pipeline_mode = #tpu.pipeline_mode<synchronous>, transform_indices = @transform_6, window_bounds = array<i64: 1, 64>}, {pipeline_mode = #tpu.pipeline_mode<synchronous>, transform_indices = @transform_7, window_bounds = array<i64: 128, 1>}, {pipeline_mode = #tpu.pipeline_mode<synchronous>, transform_indices = @transform_8, window_bounds = array<i64: 1, 1>}, {transform_indices = @transform_9, window_bounds = array<i64: 32, 1>}]} {
    %c0 = arith.constant 0 : index
    %c0_0 = arith.constant 0 : index
    %0 = vector.load %arg1[%c0, %c0_0] : memref<32x64xf32, #tpu.memory_space<vmem>>, vector<32x64xf32>
    %c0_1 = arith.constant 0 : index
    %c0_2 = arith.constant 0 : index
    %1 = vector.load %arg2[%c0_1, %c0_2] : memref<64x320xf32, #tpu.memory_space<vmem>>, vector<64x320xf32>
    %cst = arith.constant dense<0.000000e+00> : vector<32x320xf32>
    %2 = tpu.matmul %0, %1, %cst {dimension_numbers = #tpu.dot_dimension_numbers<[1], [0], [0], [1], [0, 0, 1, 1], [], []>} : vector<32x64xf32>, vector<64x320xf32>, vector<32x320xf32> -> vector<32x320xf32>
    %c0_3 = arith.constant 0 : index
    %c0_4 = arith.constant 0 : index
    %3 = vector.load %arg3[%c0_3, %c0_4] : memref<1x320xf32, #tpu.memory_space<vmem>>, vector<1x320xf32>
    %4 = vector.broadcast %3 : vector<1x320xf32> to vector<32x320xf32>
    %5 = arith.addf %2, %4 : vector<32x320xf32>
    %6 = vector.extract_strided_slice %5 {offsets = [0, 0], sizes = [32, 160], strides = [1, 1]} : vector<32x320xf32> to vector<32x160xf32>
    %7 = math.tanh %6 : vector<32x160xf32>
    %8 = vector.extract_strided_slice %5 {offsets = [0, 160], sizes = [32, 160], strides = [1, 1]} : vector<32x320xf32> to vector<32x160xf32>
    %9 = arith.negf %8 : vector<32x160xf32>
    %10 = math.exp %9 : vector<32x160xf32>
    %cst_5 = arith.constant 1.000000e+00 : f32
    %11 = vector.broadcast %cst_5 : f32 to vector<32x160xf32>
    %12 = arith.addf %11, %10 : vector<32x160xf32>
    %13 = arith.divf %11, %12 : vector<32x160xf32>
    %14 = arith.mulf %7, %13 : vector<32x160xf32>
    %15 = vector.extract_strided_slice %14 {offsets = [0, 64], sizes = [32, 48], strides = [1, 1]} : vector<32x160xf32> to vector<32x48xf32>
    %16 = vector.extract_strided_slice %14 {offsets = [0, 112], sizes = [32, 48], strides = [1, 1]} : vector<32x160xf32> to vector<32x48xf32>
    %c0_6 = arith.constant 0 : index
    %c0_7 = arith.constant 0 : index
    %17 = vector.load %arg4[%c0_6, %c0_7] : memref<48x64xf32, #tpu.memory_space<vmem>>, vector<48x64xf32>
    %cst_8 = arith.constant dense<0.000000e+00> : vector<32x64xf32>
    %18 = tpu.matmul %15, %17, %cst_8 {dimension_numbers = #tpu.dot_dimension_numbers<[1], [0], [0], [1], [0, 0, 1, 1], [], []>} : vector<32x48xf32>, vector<48x64xf32>, vector<32x64xf32> -> vector<32x64xf32>
    %c0_9 = arith.constant 0 : index
    %c0_10 = arith.constant 0 : index
    %19 = vector.load %arg5[%c0_9, %c0_10] : memref<1x64xf32, #tpu.memory_space<vmem>>, vector<1x64xf32>
    %20 = vector.broadcast %19 : vector<1x64xf32> to vector<32x64xf32>
    %21 = arith.addf %18, %20 : vector<32x64xf32>
    %22 = vector.extract_strided_slice %21 {offsets = [0, 0], sizes = [32, 32], strides = [1, 1]} : vector<32x64xf32> to vector<32x32xf32>
    %23 = math.tanh %22 : vector<32x32xf32>
    %24 = vector.extract_strided_slice %21 {offsets = [0, 32], sizes = [32, 32], strides = [1, 1]} : vector<32x64xf32> to vector<32x32xf32>
    %25 = arith.negf %24 : vector<32x32xf32>
    %26 = math.exp %25 : vector<32x32xf32>
    %cst_11 = arith.constant 1.000000e+00 : f32
    %27 = vector.broadcast %cst_11 : f32 to vector<32x32xf32>
    %28 = arith.addf %27, %26 : vector<32x32xf32>
    %29 = arith.divf %27, %28 : vector<32x32xf32>
    %30 = arith.mulf %23, %29 : vector<32x32xf32>
    %c0_12 = arith.constant 0 : index
    %c0_13 = arith.constant 0 : index
    %31 = vector.load %arg6[%c0_12, %c0_13] : memref<48x64xf32, #tpu.memory_space<vmem>>, vector<48x64xf32>
    %cst_14 = arith.constant dense<0.000000e+00> : vector<32x64xf32>
    %32 = tpu.matmul %16, %31, %cst_14 {dimension_numbers = #tpu.dot_dimension_numbers<[1], [0], [0], [1], [0, 0, 1, 1], [], []>} : vector<32x48xf32>, vector<48x64xf32>, vector<32x64xf32> -> vector<32x64xf32>
    %c0_15 = arith.constant 0 : index
    %c0_16 = arith.constant 0 : index
    %33 = vector.load %arg7[%c0_15, %c0_16] : memref<1x64xf32, #tpu.memory_space<vmem>>, vector<1x64xf32>
    %34 = vector.broadcast %33 : vector<1x64xf32> to vector<32x64xf32>
    %35 = arith.addf %32, %34 : vector<32x64xf32>
    %36 = vector.extract_strided_slice %35 {offsets = [0, 0], sizes = [32, 32], strides = [1, 1]} : vector<32x64xf32> to vector<32x32xf32>
    %37 = math.tanh %36 : vector<32x32xf32>
    %38 = vector.extract_strided_slice %35 {offsets = [0, 32], sizes = [32, 32], strides = [1, 1]} : vector<32x64xf32> to vector<32x32xf32>
    %39 = arith.negf %38 : vector<32x32xf32>
    %40 = math.exp %39 : vector<32x32xf32>
    %cst_17 = arith.constant 1.000000e+00 : f32
    %41 = vector.broadcast %cst_17 : f32 to vector<32x32xf32>
    %42 = arith.addf %41, %40 : vector<32x32xf32>
    %43 = arith.divf %41, %42 : vector<32x32xf32>
    %44 = arith.mulf %37, %43 : vector<32x32xf32>
    %45 = vector.extract_strided_slice %14 {offsets = [0, 0], sizes = [32, 64], strides = [1, 1]} : vector<32x160xf32> to vector<32x64xf32>
    %46 = tpu.concatenate %45, %30, %44 in 1 : vector<32x64xf32>, vector<32x32xf32>, vector<32x32xf32> -> vector<32x128xf32>
    %c0_18 = arith.constant 0 : index
    %c0_19 = arith.constant 0 : index
    %47 = vector.load %arg8[%c0_18, %c0_19] : memref<128x1xf32, #tpu.memory_space<vmem>>, vector<128x1xf32>
    %cst_20 = arith.constant dense<0.000000e+00> : vector<32x1xf32>
    %48 = tpu.matmul %46, %47, %cst_20 {dimension_numbers = #tpu.dot_dimension_numbers<[1], [0], [0], [1], [0, 0, 1, 1], [], []>} : vector<32x128xf32>, vector<128x1xf32>, vector<32x1xf32> -> vector<32x1xf32>
    %c0_21 = arith.constant 0 : index
    %c0_22 = arith.constant 0 : index
    %49 = vector.load %arg9[%c0_21, %c0_22] : memref<1x1xf32, #tpu.memory_space<vmem>>, vector<1x1xf32>
    %50 = vector.broadcast %49 : vector<1x1xf32> to vector<32x1xf32>
    %51 = arith.addf %48, %50 : vector<32x1xf32>
    %c0_23 = arith.constant 0 : index
    %c0_24 = arith.constant 0 : index
    %52 = vector.load %arg10[%c0_23, %c0_24] : memref<32x1xf32, #tpu.memory_space<vmem>>, vector<32x1xf32>
    tpu.vector_store %arg10[%c0_23, %c0_24], %51 {strides = array<i32>} : memref<32x1xf32, #tpu.memory_space<vmem>>, vector<32x1xf32>,
    return
  }
  func.func @transform_0(%arg0: i32) -> (i32, i32) {
    %c0_i32 = arith.constant 0 : i32
    %c0_i32_0 = arith.constant 0 : i32
    return %arg0, %c0_i32 : i32, i32
  }
  func.func @transform_1(%arg0: i32) -> (i32, i32) {
    %c0_i32 = arith.constant 0 : i32
    %c0_i32_0 = arith.constant 0 : i32
    %c0_i32_1 = arith.constant 0 : i32
    return %c0_i32, %c0_i32_0 : i32, i32
  }
  func.func @transform_2(%arg0: i32) -> (i32, i32) {
    %c0_i32 = arith.constant 0 : i32
    %c0_i32_0 = arith.constant 0 : i32
    %c0_i32_1 = arith.constant 0 : i32
    return %c0_i32, %c0_i32_0 : i32, i32
  }
  func.func @transform_3(%arg0: i32) -> (i32, i32) {
    %c0_i32 = arith.constant 0 : i32
    %c0_i32_0 = arith.constant 0 : i32
    %c0_i32_1 = arith.constant 0 : i32
    return %c0_i32, %c0_i32_0 : i32, i32
  }
  func.func @transform_4(%arg0: i32) -> (i32, i32) {
    %c0_i32 = arith.constant 0 : i32
    %c0_i32_0 = arith.constant 0 : i32
    %c0_i32_1 = arith.constant 0 : i32
    return %c0_i32, %c0_i32_0 : i32, i32
  }
  func.func @transform_5(%arg0: i32) -> (i32, i32) {
    %c0_i32 = arith.constant 0 : i32
    %c0_i32_0 = arith.constant 0 : i32
    %c0_i32_1 = arith.constant 0 : i32
    return %c0_i32, %c0_i32_0 : i32, i32
  }
  func.func @transform_6(%arg0: i32) -> (i32, i32) {
    %c0_i32 = arith.constant 0 : i32
    %c0_i32_0 = arith.constant 0 : i32
    %c0_i32_1 = arith.constant 0 : i32
    return %c0_i32, %c0_i32_0 : i32, i32
  }
  func.func @transform_7(%arg0: i32) -> (i32, i32) {
    %c0_i32 = arith.constant 0 : i32
    %c0_i32_0 = arith.constant 0 : i32
    %c0_i32_1 = arith.constant 0 : i32
    return %c0_i32, %c0_i32_0 : i32, i32
  }
  func.func @transform_8(%arg0: i32) -> (i32, i32) {
    %c0_i32 = arith.constant 0 : i32
    %c0_i32_0 = arith.constant 0 : i32
    %c0_i32_1 = arith.constant 0 : i32
    return %c0_i32, %c0_i32_0 : i32, i32
  }
  func.func @transform_9(%arg0: i32) -> (i32, i32) {
    %c0_i32 = arith.constant 0 : i32
    %c0_i32_0 = arith.constant 0 : i32
    return %arg0, %c0_i32 : i32, i32
  }
}

</mosaic_0001>

<llo_original>
// kernel: tpu_custom_call.1
$region0: #{tpu_custom_call.1}
  #allocation0 [shape = 'u32[]', space=smem, size = 0x4, offset = 0x4, fixed_abs, tag = 'smem constant byte address 0x4 - core index']
  #allocation1 [shape = 'u32[144,128]{1,0:T(1,128)}', space=vmem, size = 0x12000, scoped, tag = 'internal scratch']
  #allocation2 [shape = 'f32[1,1]{1,0:T(1,128)S(1)}', space=vmem, size = 0x200, scoped, tag = 'scoped memory for tpu_custom_call.1']
  %s0 = inlined_call_operand.vmem [shape: f32[32,64], index: 0, kind: input, shape index: {}]
  %s1 = inlined_call_operand.hbm [shape: f32[64,320], index: 1, kind: input, shape index: {}]
  %s2 = inlined_call_operand.vmem [shape: f32[1,320], index: 2, kind: input, shape index: {}]
  %s3 = inlined_call_operand.vmem [shape: f32[48,64], index: 3, kind: input, shape index: {}]
  %s4 = inlined_call_operand.vmem [shape: f32[1,64], index: 4, kind: input, shape index: {}]
  %s5 = inlined_call_operand.vmem [shape: f32[48,64], index: 5, kind: input, shape index: {}]
  %s6 = inlined_call_operand.vmem [shape: f32[1,64], index: 6, kind: input, shape index: {}]
  %s7 = inlined_call_operand.vmem [shape: f32[128,1], index: 7, kind: input, shape index: {}]
  %s8 = inlined_call_operand.<no memory space> [shape: f32[1,1], index: 8, kind: input, shape index: {}]
  %s9 = inlined_call_operand.vmem [shape: f32[32,1], index: 9, kind: output, shape index: {}]
  %s10 = sld [smem:[#allocation0]]
  $region50: #{tpu_custom_call.1} parent=0
    _
  %s12 = ssub.s32 1, %s10
  %s13 = scalar_select 0, %s12, %s10
  %v14 = vstv %s8
  %15 = vst [vmem:[#allocation2] sm:$0x1] %v14
  $region1: #{tpu_custom_call.1} parent=0
    #allocation3 [shape = 'u8[98304]{0}', space=vmem, size = 0x18000, scoped, tag = 'input window, operand 1, single buffered']
    #allocation4 [shape = 's32[1]{0}', space=sflag, size = 0x4, scoped, tag = 'scoped memory for tpu_custom_call.1']
    %16 = vsyncpa [#allocation4], 0
    // Predicated region
    $region2: #{tpu_custom_call.1} parent=1 // pred_check
      _
    $region3: #{tpu_custom_call.1} parent=1 // pred_check_branch
      %18 = sbr.rel (0) target = $region5
    $region4: #{tpu_custom_call.1} parent=1 // pred_region
      _
    $region5: #{tpu_custom_call.1} parent=1 // pred_fallthru
      _
    // Predicated region
    $region6: #{tpu_custom_call.1} parent=1 // pred_check
      _
    $region7: #{tpu_custom_call.1} parent=1 // pred_check_branch
      %20 = sbr.rel (0) target = $region9
    $region8: #{tpu_custom_call.1} parent=1 // pred_region
      %s22 = ssub.s32 3072, 3072
      %23 = vsyncadd [#allocation4], %s22
      %s24 = sshll.u32 [#allocation3], 4
      %s25 = int_to_ptr.vmem [resolvable:$true] %s24
      %30 = dma.hbm_to_vmem [thread:$0]  %s1, 3072, %s25, [#allocation4], 384, 384, 24
    $region9: #{tpu_custom_call.1} parent=1 // pred_fallthru
      _
    // Predicated region
    $region10: #{tpu_custom_call.1} parent=1 // pred_check
      _
    $region11: #{tpu_custom_call.1} parent=1 // pred_check_branch
      %32 = sbr.rel (0) target = $region13
    $region12: #{tpu_custom_call.1} parent=1 // pred_region
      _
    $region13: #{tpu_custom_call.1} parent=1 // pred_fallthru
      _
    // Predicated region
    $region14: #{tpu_custom_call.1} parent=1 // pred_check
      _
    $region15: #{tpu_custom_call.1} parent=1 // pred_check_branch
      %34 = sbr.rel (0) target = $region17
    $region16: #{tpu_custom_call.1} parent=1 // pred_region
      _
    $region17: #{tpu_custom_call.1} parent=1 // pred_fallthru
      _
    // Predicated region
    $region18: #{tpu_custom_call.1} parent=1 // pred_check
      _
    $region19: #{tpu_custom_call.1} parent=1 // pred_check_branch
      %36 = sbr.rel (0) target = $region21
    $region20: #{tpu_custom_call.1} parent=1 // pred_region
      _
    $region21: #{tpu_custom_call.1} parent=1 // pred_fallthru
      _
    // Predicated region
    $region22: #{tpu_custom_call.1} parent=1 // pred_check
      _
    $region23: #{tpu_custom_call.1} parent=1 // pred_check_branch
      %38 = sbr.rel (0) target = $region25
    $region24: #{tpu_custom_call.1} parent=1 // pred_region
      _
    $region25: #{tpu_custom_call.1} parent=1 // pred_fallthru
      _
    // Predicated region
    $region26: #{tpu_custom_call.1} parent=1 // pred_check
      _
    $region27: #{tpu_custom_call.1} parent=1 // pred_check_branch
      %40 = sbr.rel (0) target = $region29
    $region28: #{tpu_custom_call.1} parent=1 // pred_region
      _
    $region29: #{tpu_custom_call.1} parent=1 // pred_fallthru
      _
    // Predicated region
    $region30: #{tpu_custom_call.1} parent=1 // pred_check
      _
    $region31: #{tpu_custom_call.1} parent=1 // pred_check_branch
      %42 = sbr.rel (0) target = $region33
    $region32: #{tpu_custom_call.1} parent=1 // pred_region
      _
    $region33: #{tpu_custom_call.1} parent=1 // pred_fallthru
      _
    // Predicated region
    $region34: #{tpu_custom_call.1} parent=1 // pred_check
      _
    $region35: #{tpu_custom_call.1} parent=1 // pred_check_branch
      %44 = sbr.rel (0) target = $region37
    $region36: #{tpu_custom_call.1} parent=1 // pred_region
      _
    $region37: #{tpu_custom_call.1} parent=1 // pred_fallthru
      _
    // Predicated region
    $region38: #{tpu_custom_call.1} parent=1 // pred_check
      _
    $region39: #{tpu_custom_call.1} parent=1 // pred_check_branch
      %46 = sbr.rel (0) target = $region41
    $region40: #{tpu_custom_call.1} parent=1 // pred_region
      %47 = dma.done [#allocation4], 3072
    $region41: #{tpu_custom_call.1} parent=1 // pred_fallthru
      _
    %v48 = vld [vmem:[%s0] sm:$0xff]
    %v49 = vld [vmem:[%s0 + $0x8] sm:$0xff]
    %v50 = vld [vmem:[%s0 + $0x10] sm:$0xff]
    %v51 = vld [vmem:[%s0 + $0x18] sm:$0xff]
    %v52 = vld [vmem:[#allocation3] sm:$0xff]
    %v53 = vld [vmem:[#allocation3 + $0x8] sm:$0xff]
    %v54 = vld [vmem:[#allocation3 + $0x10] sm:$0xff]
    %v55 = vld [vmem:[#allocation3 + $0x18] sm:$0xff]
    %v56 = vld [vmem:[#allocation3 + $0x20] sm:$0xff]
    %v57 = vld [vmem:[#allocation3 + $0x28] sm:$0xff]
    %v58 = vld [vmem:[#allocation3 + $0x30] sm:$0xff]
    %v59 = vld [vmem:[#allocation3 + $0x38] sm:$0xff]
    %v60 = vld [vmem:[#allocation3 + $0x40] sm:$0xff]
    %v61 = vld [vmem:[#allocation3 + $0x48] sm:$0xff]
    %v62 = vld [vmem:[#allocation3 + $0x50] sm:$0xff]
    %v63 = vld [vmem:[#allocation3 + $0x58] sm:$0xff]
    %v64 = vld [vmem:[#allocation3 + $0x60] sm:$0xff]
    %v65 = vld [vmem:[#allocation3 + $0x68] sm:$0xff]
    %v66 = vld [vmem:[#allocation3 + $0x70] sm:$0xff]
    %v67 = vld [vmem:[#allocation3 + $0x78] sm:$0xff]
    %v68 = vld [vmem:[#allocation3 + $0x80] sm:$0xff]
    %v69 = vld [vmem:[#allocation3 + $0x88] sm:$0xff]
    %v70 = vld [vmem:[#allocation3 + $0x90] sm:$0xff]
    %v71 = vld [vmem:[#allocation3 + $0x98] sm:$0xff]
    %v72 = vld [vmem:[#allocation3 + $0xa0] sm:$0xff]
    %v73 = vld [vmem:[#allocation3 + $0xa8] sm:$0xff]
    %v74 = vld [vmem:[#allocation3 + $0xb0] sm:$0xff]
    %v75 = vld [vmem:[#allocation3 + $0xb8] sm:$0xff]
    %v76 = vld [vmem:[%s2] sm:$0x7]
    %v78 = vlaneseq
    %v79 = vshrl.u32 %v78, 7
    %v80 = vsub.s32 0, %v79
    %v81 = vrot.slane %v76, %v80
    %v82 = vlaneseq
    %v83 = vshrl.u32 %v82, 7
    %v84 = vsub.s32 1, %v83
    %v85 = vrot.slane %v76, %v84
    %v86 = vlaneseq
    %v87 = vshrl.u32 %v86, 7
    %v88 = vsub.s32 2, %v87
    %v89 = vrot.slane %v76, %v88
    %vm93 = vcmask 523264
    %v95 = vsel %vm93, %v48, 0
    %v98 = vsel %vm93, %v49, 0
    %v101 = vsel %vm93, %v50, 0
    %v104 = vsel %vm93, %v51, 0
    %106 = vmatprep.subr.mxu0 0.0
    %107 = vmatpush1.msra.mxu0 0.0
    %108 = vmatprep.subr.mxu0 0.0
    %109 = vmatpush1.msra.mxu0 0.0
    %110 = vmatprep.subr.mxu0 0.0
    %111 = vmatpush1.msra.mxu0 0.0
    %112 = vmatprep.subr.mxu0 0.0
    %113 = vmatpush1.msra.mxu0 0.0
    %114 = vmatprep.subr.mxu0 0.0
    %115 = vmatpush1.msra.mxu0 0.0
    %116 = vmatprep.subr.mxu0 0.0
    %117 = vmatpush1.msra.mxu0 0.0
    %118 = vmatprep.subr.mxu0 0.0
    %119 = vmatpush1.msra.mxu0 0.0
    %120 = vmatprep.subr.mxu0 0.0
    %121 = vmatpush1.msra.mxu0 0.0
    %122 = vmatprep.subr.mxu0 %v74
    %123 = vmatpush1.msra.mxu0 %v73
    %124 = vmatprep.subr.mxu0 %v71
    %125 = vmatpush1.msra.mxu0 %v70
    %126 = vmatprep.subr.mxu0 %v68
    %127 = vmatpush1.msra.mxu0 %v67
    %128 = vmatprep.subr.mxu0 %v65
    %129 = vmatpush1.msra.mxu0 %v64
    %130 = vmatprep.subr.mxu0 %v62
    %131 = vmatpush1.msra.mxu0 %v61
    %132 = vmatprep.subr.mxu0 %v59
    %133 = vmatpush1.msra.mxu0 %v58
    %134 = vmatprep.subr.mxu0 %v56
    %135 = vmatpush1.msra.mxu0 %v55
    %136 = vmatprep.subr.mxu0 %v53
    %137 = vmatpush1.msra.mxu0 %v52
    %138 = vmatprep.subr.mxu0 0.0
    %139 = vmatpush2.msra.mxu0 0.0
    %140 = vmatprep.subr.mxu0 0.0
    %141 = vmatpush2.msra.mxu0 0.0
    %142 = vmatprep.subr.mxu0 0.0
    %143 = vmatpush2.msra.mxu0 0.0
    %144 = vmatprep.subr.mxu0 0.0
    %145 = vmatpush2.msra.mxu0 0.0
    %146 = vmatprep.subr.mxu0 0.0
    %147 = vmatpush2.msra.mxu0 0.0
    %148 = vmatprep.subr.mxu0 0.0
    %149 = vmatpush2.msra.mxu0 0.0
    %150 = vmatprep.subr.mxu0 0.0
    %151 = vmatpush2.msra.mxu0 0.0
    %152 = vmatprep.subr.mxu0 0.0
    %153 = vmatpush2.msra.mxu0 0.0
    %154 = vmatprep.subr.mxu0 0.0
    %155 = vmatpush2.msra.mxu0 0.0
    %156 = vmatprep.subr.mxu0 0.0
    %157 = vmatpush2.msra.mxu0 0.0
    %158 = vmatprep.subr.mxu0 0.0
    %159 = vmatpush2.msra.mxu0 0.0
    %160 = vmatprep.subr.mxu0 0.0
    %161 = vmatpush2.msra.mxu0 0.0
    %162 = vmatprep.subr.mxu0 0.0
    %163 = vmatpush2.msra.mxu0 0.0
    %164 = vmatprep.subr.mxu0 0.0
    %165 = vmatpush2.msra.mxu0 0.0
    %166 = vmatprep.subr.mxu0 0.0
    %167 = vmatpush2.msra.mxu0 0.0
    %168 = vmatprep.subr.mxu0 0.0
    %169 = vmatpush2.msra.mxu0 0.0
    %170 = vmatprep.mubr.f32.mxu0 0.0
    %171 = vmatmul.mubr.f32.gmra.mxu0 %v95
    %v172 = vpop.f32.mrf.mxu0
    %v173 = vadd.f32 %v81, %v172
    %v174 = vpop.f32.mrf.mxu0
    %v175 = vadd.f32 %v85, %v174
    %176 = vmatprep.mubr.f32.mxu0 0.0
    %177 = vmatmul.mubr.f32.gmra.mxu0 %v98
    %v178 = vpop.f32.mrf.mxu0
    %v179 = vadd.f32 %v81, %v178
    %v180 = vpop.f32.mrf.mxu0
    %v181 = vadd.f32 %v85, %v180
    %182 = vmatprep.mubr.f32.mxu0 0.0
    %183 = vmatmul.mubr.f32.gmra.mxu0 %v101
    %v184 = vpop.f32.mrf.mxu0
    %v185 = vadd.f32 %v81, %v184
    %v186 = vpop.f32.mrf.mxu0
    %v187 = vadd.f32 %v85, %v186
    %188 = vmatprep.mubr.f32.mxu0 0.0
    %189 = vmatmul.mubr.f32.gmra.mxu0 %v104
    %v190 = vpop.f32.mrf.mxu0
    %v191 = vadd.f32 %v81, %v190
    %v192 = vpop.f32.mrf.mxu0
    %v193 = vadd.f32 %v85, %v192
    %194 = vdwg.mxu0
    %195 = vmatprep.subr.mxu0 0.0
    %196 = vmatpush1.msra.mxu0 0.0
    %197 = vmatprep.subr.mxu0 0.0
    %198 = vmatpush1.msra.mxu0 0.0
    %199 = vmatprep.subr.mxu0 0.0
    %200 = vmatpush1.msra.mxu0 0.0
    %201 = vmatprep.subr.mxu0 0.0
    %202 = vmatpush1.msra.mxu0 0.0
    %203 = vmatprep.subr.mxu0 0.0
    %204 = vmatpush1.msra.mxu0 0.0
    %205 = vmatprep.subr.mxu0 0.0
    %206 = vmatpush1.msra.mxu0 0.0
    %207 = vmatprep.subr.mxu0 0.0
    %208 = vmatpush1.msra.mxu0 0.0
    %209 = vmatprep.subr.mxu0 0.0
    %210 = vmatpush1.msra.mxu0 0.0
    %211 = vmatprep.subr.mxu0 0.0
    %212 = vmatpush1.msra.mxu0 %v75
    %213 = vmatprep.subr.mxu0 0.0
    %214 = vmatpush1.msra.mxu0 %v72
    %215 = vmatprep.subr.mxu0 0.0
    %216 = vmatpush1.msra.mxu0 %v69
    %217 = vmatprep.subr.mxu0 0.0
    %218 = vmatpush1.msra.mxu0 %v66
    %219 = vmatprep.subr.mxu0 0.0
    %220 = vmatpush1.msra.mxu0 %v63
    %221 = vmatprep.subr.mxu0 0.0
    %222 = vmatpush1.msra.mxu0 %v60
    %223 = vmatprep.subr.mxu0 0.0
    %224 = vmatpush1.msra.mxu0 %v57
    %225 = vmatprep.subr.mxu0 0.0
    %226 = vmatpush1.msra.mxu0 %v54
    %227 = vmatprep.subr.mxu0 0.0
    %228 = vmatpush2.msra.mxu0 0.0
    %229 = vmatprep.subr.mxu0 0.0
    %230 = vmatpush2.msra.mxu0 0.0
    %231 = vmatprep.subr.mxu0 0.0
    %232 = vmatpush2.msra.mxu0 0.0
    %233 = vmatprep.subr.mxu0 0.0
    %234 = vmatpush2.msra.mxu0 0.0
    %235 = vmatprep.subr.mxu0 0.0
    %236 = vmatpush2.msra.mxu0 0.0
    %237 = vmatprep.subr.mxu0 0.0
    %238 = vmatpush2.msra.mxu0 0.0
    %239 = vmatprep.subr.mxu0 0.0
    %240 = vmatpush2.msra.mxu0 0.0
    %241 = vmatprep.subr.mxu0 0.0
    %242 = vmatpush2.msra.mxu0 0.0
    %243 = vmatprep.subr.mxu0 0.0
    %244 = vmatpush2.msra.mxu0 0.0
    %245 = vmatprep.subr.mxu0 0.0
    %246 = vmatpush2.msra.mxu0 0.0
    %247 = vmatprep.subr.mxu0 0.0
    %248 = vmatpush2.msra.mxu0 0.0
    %249 = vmatprep.subr.mxu0 0.0
    %250 = vmatpush2.msra.mxu0 0.0
    %251 = vmatprep.subr.mxu0 0.0
    %252 = vmatpush2.msra.mxu0 0.0
    %253 = vmatprep.subr.mxu0 0.0
    %254 = vmatpush2.msra.mxu0 0.0
    %255 = vmatprep.subr.mxu0 0.0
    %256 = vmatpush2.msra.mxu0 0.0
    %257 = vmatprep.subr.mxu0 0.0
    %258 = vmatpush2.msra.mxu0 0.0
    %259 = vmatprep.mubr.f32.mxu0 0.0
    %260 = vmatmul.mubr.f32.gmra.mxu0 %v95
    %v261 = vpop.f32.mrf.mxu0
    %v262 = vadd.f32 %v89, %v261
    %v263 = vpop.f32.mrf.mxu0
    %264 = vmatprep.mubr.f32.mxu0 0.0
    %265 = vmatmul.mubr.f32.gmra.mxu0 %v98
    %v266 = vpop.f32.mrf.mxu0
    %v267 = vadd.f32 %v89, %v266
    %v268 = vpop.f32.mrf.mxu0
    %269 = vmatprep.mubr.f32.mxu0 0.0
    %270 = vmatmul.mubr.f32.gmra.mxu0 %v101
    %v271 = vpop.f32.mrf.mxu0
    %v272 = vadd.f32 %v89, %v271
    %v273 = vpop.f32.mrf.mxu0
    %274 = vmatprep.mubr.f32.mxu0 0.0
    %275 = vmatmul.mubr.f32.gmra.mxu0 %v104
    %v276 = vpop.f32.mrf.mxu0
    %v277 = vadd.f32 %v89, %v276
    %v278 = vpop.f32.mrf.mxu0
    %279 = vdwg.mxu0
    %v280 = vtanh.pop %v173
    %v281 = vtanh.pop %v175
    %v282 = vtanh.pop %v179
    %v283 = vtanh.pop %v181
    %v284 = vtanh.pop %v185
    %v285 = vtanh.pop %v187
    %v286 = vtanh.pop %v191
    %v287 = vtanh.pop %v193
    %v288 = vxor.u32 %v175, 2147483648
    %v289 = vxor.u32 %v262, 2147483648
    %v290 = vxor.u32 %v181, 2147483648
    %v291 = vxor.u32 %v267, 2147483648
    %v292 = vxor.u32 %v187, 2147483648
    %v293 = vxor.u32 %v272, 2147483648
    %v294 = vxor.u32 %v193, 2147483648
    %v295 = vxor.u32 %v277, 2147483648
    %v296 = vmul.f32 %v288, 1.442695
    %v297 = vpow.pop %v296
    %v298 = vmul.f32 %v289, 1.442695
    %v299 = vpow.pop %v298
    %v300 = vmul.f32 %v290, 1.442695
    %v301 = vpow.pop %v300
    %v302 = vmul.f32 %v291, 1.442695
    %v303 = vpow.pop %v302
    %v304 = vmul.f32 %v292, 1.442695
    %v305 = vpow.pop %v304
    %v306 = vmul.f32 %v293, 1.442695
    %v307 = vpow.pop %v306
    %v308 = vmul.f32 %v294, 1.442695
    %v309 = vpow.pop %v308
    %v310 = vmul.f32 %v295, 1.442695
    %v311 = vpow.pop %v310
    %v312 = vadd.f32 %v297, 1.0
    %v313 = vadd.f32 %v299, 1.0
    %v314 = vadd.f32 %v301, 1.0
    %v315 = vadd.f32 %v303, 1.0
    %v316 = vadd.f32 %v305, 1.0
    %v317 = vadd.f32 %v307, 1.0
    %v318 = vadd.f32 %v309, 1.0
    %v319 = vadd.f32 %v311, 1.0
    %v320 = vrcp.pop %v312
    %v321 = vmul.f32 1.0, %v320
    %v322 = vrcp.pop %v313
    %v323 = vmul.f32 1.0, %v322
    %v324 = vrcp.pop %v314
    %v325 = vmul.f32 1.0, %v324
    %v326 = vrcp.pop %v315
    %v327 = vmul.f32 1.0, %v326
    %v328 = vrcp.pop %v316
    %v329 = vmul.f32 1.0, %v328
    %v330 = vrcp.pop %v317
    %v331 = vmul.f32 1.0, %v330
    %v332 = vrcp.pop %v318
    %v333 = vmul.f32 1.0, %v332
    %v334 = vrcp.pop %v319
    %v335 = vmul.f32 1.0, %v334
    %344 = vrot.lane.b32.xlu0 %v321, 96
    %v345 = vpop.permute.xlu0 %344
    %346 = vrot.lane.b32.xlu0 %v323, 96
    %v347 = vpop.permute.xlu0 %346
    %348 = vrot.lane.b32.xlu0 %v325, 96
    %v349 = vpop.permute.xlu0 %348
    %350 = vrot.lane.b32.xlu0 %v327, 96
    %v351 = vpop.permute.xlu0 %350
    %352 = vrot.lane.b32.xlu0 %v329, 96
    %v353 = vpop.permute.xlu0 %352
    %354 = vrot.lane.b32.xlu0 %v331, 96
    %v355 = vpop.permute.xlu0 %354
    %356 = vrot.lane.b32.xlu0 %v333, 96
    %v357 = vpop.permute.xlu0 %356
    %358 = vrot.lane.b32.xlu0 %v335, 96
    %v359 = vpop.permute.xlu0 %358
    %vm360 = vcmask 785408
    %v361 = vsel %vm360, %v345, %v347
    %v362 = vsel %vm360, %v349, %v351
    %v363 = vsel %vm360, %v353, %v355
    %v364 = vsel %vm360, %v357, %v359
    %v373 = vmul.f32 %v280, %v361
    %v374 = vmul.f32 %v281, %v347
    %v375 = vmul.f32 %v282, %v362
    %v376 = vmul.f32 %v283, %v351
    %v377 = vmul.f32 %v284, %v363
    %v378 = vmul.f32 %v285, %v355
    %v379 = vmul.f32 %v286, %v364
    %v380 = vmul.f32 %v287, %v359
    %v381 = vld [vmem:[%s3] sm:$0xff]
    %v382 = vld [vmem:[%s3 + $0x8] sm:$0xff]
    %v383 = vld [vmem:[%s3 + $0x10] sm:$0xff]
    %v384 = vld [vmem:[%s3 + $0x18] sm:$0xff]
    %v385 = vld [vmem:[%s3 + $0x20] sm:$0xff]
    %v386 = vld [vmem:[%s3 + $0x28] sm:$0xff]
    %v387 = vld [vmem:[%s4] sm:$0x1]
    %v389 = vlaneseq
    %v390 = vshrl.u32 %v389, 7
    %v391 = vsub.s32 0, %v390
    %v392 = vrot.slane %v387, %v391
    %398 = vrot.lane.b32.xlu0 %v373, 64
    %v399 = vpop.permute.xlu0 %398
    %400 = vrot.lane.b32.xlu0 %v375, 64
    %v401 = vpop.permute.xlu0 %400
    %402 = vrot.lane.b32.xlu0 %v377, 64
    %v403 = vpop.permute.xlu0 %402
    %404 = vrot.lane.b32.xlu0 %v379, 64
    %v405 = vpop.permute.xlu0 %404
    %vm406 = vcmask 392192
    %v407 = vsel %vm406, %v399, 0
    %v409 = vsel %vm406, %v401, 0
    %v411 = vsel %vm406, %v403, 0
    %v413 = vsel %vm406, %v405, 0
    %415 = vmatprep.subr.mxu0 0.0
    %416 = vmatpush1.msra.mxu0 0.0
    %417 = vmatprep.subr.mxu0 0.0
    %418 = vmatpush1.msra.mxu0 0.0
    %419 = vmatprep.subr.mxu0 0.0
    %420 = vmatpush1.msra.mxu0 0.0
    %421 = vmatprep.subr.mxu0 0.0
    %422 = vmatpush1.msra.mxu0 0.0
    %423 = vmatprep.subr.mxu0 0.0
    %424 = vmatpush1.msra.mxu0 0.0
    %425 = vmatprep.subr.mxu0 0.0
    %426 = vmatpush1.msra.mxu0 0.0
    %427 = vmatprep.subr.mxu0 0.0
    %428 = vmatpush1.msra.mxu0 0.0
    %429 = vmatprep.subr.mxu0 0.0
    %430 = vmatpush1.msra.mxu0 0.0
    %431 = vmatprep.subr.mxu0 0.0
    %432 = vmatpush1.msra.mxu0 0.0
    %433 = vmatprep.subr.mxu0 0.0
    %434 = vmatpush1.msra.mxu0 0.0
    %435 = vmatprep.subr.mxu0 0.0
    %436 = vmatpush1.msra.mxu0 %v386
    %437 = vmatprep.subr.mxu0 0.0
    %438 = vmatpush1.msra.mxu0 %v385
    %439 = vmatprep.subr.mxu0 0.0
    %440 = vmatpush1.msra.mxu0 %v384
    %441 = vmatprep.subr.mxu0 0.0
    %442 = vmatpush1.msra.mxu0 %v383
    %443 = vmatprep.subr.mxu0 0.0
    %444 = vmatpush1.msra.mxu0 %v382
    %445 = vmatprep.subr.mxu0 0.0
    %446 = vmatpush1.msra.mxu0 %v381
    %447 = vmatprep.subr.mxu0 0.0
    %448 = vmatpush2.msra.mxu0 0.0
    %449 = vmatprep.subr.mxu0 0.0
    %450 = vmatpush2.msra.mxu0 0.0
    %451 = vmatprep.subr.mxu0 0.0
    %452 = vmatpush2.msra.mxu0 0.0
    %453 = vmatprep.subr.mxu0 0.0
    %454 = vmatpush2.msra.mxu0 0.0
    %455 = vmatprep.subr.mxu0 0.0
    %456 = vmatpush2.msra.mxu0 0.0
    %457 = vmatprep.subr.mxu0 0.0
    %458 = vmatpush2.msra.mxu0 0.0
    %459 = vmatprep.subr.mxu0 0.0
    %460 = vmatpush2.msra.mxu0 0.0
    %461 = vmatprep.subr.mxu0 0.0
    %462 = vmatpush2.msra.mxu0 0.0
    %463 = vmatprep.subr.mxu0 0.0
    %464 = vmatpush2.msra.mxu0 0.0
    %465 = vmatprep.subr.mxu0 0.0
    %466 = vmatpush2.msra.mxu0 0.0
    %467 = vmatprep.subr.mxu0 0.0
    %468 = vmatpush2.msra.mxu0 0.0
    %469 = vmatprep.subr.mxu0 0.0
    %470 = vmatpush2.msra.mxu0 0.0
    %471 = vmatprep.subr.mxu0 0.0
    %472 = vmatpush2.msra.mxu0 0.0
    %473 = vmatprep.subr.mxu0 0.0
    %474 = vmatpush2.msra.mxu0 0.0
    %475 = vmatprep.subr.mxu0 0.0
    %476 = vmatpush2.msra.mxu0 0.0
    %477 = vmatprep.subr.mxu0 0.0
    %478 = vmatpush2.msra.mxu0 0.0
    %479 = vmatprep.mubr.f32.mxu0 0.0
    %480 = vmatmul.mubr.f32.gmra.mxu0 %v407
    %v481 = vpop.f32.mrf.mxu0
    %v482 = vadd.f32 %v392, %v481
    %v483 = vpop.f32.mrf.mxu0
    %484 = vmatprep.mubr.f32.mxu0 0.0
    %485 = vmatmul.mubr.f32.gmra.mxu0 %v409
    %v486 = vpop.f32.mrf.mxu0
    %v487 = vadd.f32 %v392, %v486
    %v488 = vpop.f32.mrf.mxu0
    %489 = vmatprep.mubr.f32.mxu0 0.0
    %490 = vmatmul.mubr.f32.gmra.mxu0 %v411
    %v491 = vpop.f32.mrf.mxu0
    %v492 = vadd.f32 %v392, %v491
    %v493 = vpop.f32.mrf.mxu0
    %494 = vmatprep.mubr.f32.mxu0 0.0
    %495 = vmatmul.mubr.f32.gmra.mxu0 %v413
    %v496 = vpop.f32.mrf.mxu0
    %v497 = vadd.f32 %v392, %v496
    %v498 = vpop.f32.mrf.mxu0
    %499 = vdwg.mxu0
    %v500 = vtanh.pop %v482
    %v501 = vtanh.pop %v487
    %v502 = vtanh.pop %v492
    %v503 = vtanh.pop %v497
    %v504 = vxor.u32 %v482, 2147483648
    %v505 = vxor.u32 %v487, 2147483648
    %v506 = vxor.u32 %v492, 2147483648
    %v507 = vxor.u32 %v497, 2147483648
    %v508 = vmul.f32 %v504, 1.442695
    %v509 = vpow.pop %v508
    %v510 = vmul.f32 %v505, 1.442695
    %v511 = vpow.pop %v510
    %v512 = vmul.f32 %v506, 1.442695
    %v513 = vpow.pop %v512
    %v514 = vmul.f32 %v507, 1.442695
    %v515 = vpow.pop %v514
    %v516 = vadd.f32 %v509, 1.0
    %v517 = vadd.f32 %v511, 1.0
    %v518 = vadd.f32 %v513, 1.0
    %v519 = vadd.f32 %v515, 1.0
    %v520 = vrcp.pop %v516
    %v521 = vmul.f32 1.0, %v520
    %v522 = vrcp.pop %v517
    %v523 = vmul.f32 1.0, %v522
    %v524 = vrcp.pop %v518
    %v525 = vmul.f32 1.0, %v524
    %v526 = vrcp.pop %v519
    %v527 = vmul.f32 1.0, %v526
    %532 = vrot.lane.b32.xlu0 %v521, 96
    %v533 = vpop.permute.xlu0 %532
    %534 = vrot.lane.b32.xlu0 %v523, 96
    %v535 = vpop.permute.xlu0 %534
    %536 = vrot.lane.b32.xlu0 %v525, 96
    %v537 = vpop.permute.xlu0 %536
    %538 = vrot.lane.b32.xlu0 %v527, 96
    %v539 = vpop.permute.xlu0 %538
    %v544 = vmul.f32 %v500, %v533
    %v545 = vmul.f32 %v501, %v535
    %v546 = vmul.f32 %v502, %v537
    %v547 = vmul.f32 %v503, %v539
    %v548 = vld [vmem:[%s5] sm:$0xff]
    %v549 = vld [vmem:[%s5 + $0x8] sm:$0xff]
    %v550 = vld [vmem:[%s5 + $0x10] sm:$0xff]
    %v551 = vld [vmem:[%s5 + $0x18] sm:$0xff]
    %v552 = vld [vmem:[%s5 + $0x20] sm:$0xff]
    %v553 = vld [vmem:[%s5 + $0x28] sm:$0xff]
    %v554 = vld [vmem:[%s6] sm:$0x1]
    %v556 = vlaneseq
    %v557 = vshrl.u32 %v556, 7
    %v558 = vsub.s32 0, %v557
    %v559 = vrot.slane %v554, %v558
    %565 = vrot.lane.b32.xlu0 %v373, 16
    %v566 = vpop.permute.xlu0 %565
    %567 = vrot.lane.b32.xlu0 %v374, 16
    %v568 = vpop.permute.xlu0 %567
    %569 = vrot.lane.b32.xlu0 %v375, 16
    %v570 = vpop.permute.xlu0 %569
    %571 = vrot.lane.b32.xlu0 %v376, 16
    %v572 = vpop.permute.xlu0 %571
    %573 = vrot.lane.b32.xlu0 %v377, 16
    %v574 = vpop.permute.xlu0 %573
    %575 = vrot.lane.b32.xlu0 %v378, 16
    %v576 = vpop.permute.xlu0 %575
    %577 = vrot.lane.b32.xlu0 %v379, 16
    %v578 = vpop.permute.xlu0 %577
    %579 = vrot.lane.b32.xlu0 %v380, 16
    %v580 = vpop.permute.xlu0 %579
    %vm581 = vcmask 130048
    %v582 = vsel %vm581, %v566, %v568
    %v583 = vsel %vm581, %v570, %v572
    %v584 = vsel %vm581, %v574, %v576
    %v585 = vsel %vm581, %v578, %v580
    %v586 = vsel %vm406, %v582, 0
    %v588 = vsel %vm406, %v583, 0
    %v590 = vsel %vm406, %v584, 0
    %v592 = vsel %vm406, %v585, 0
    %594 = vmatprep.subr.mxu0 0.0
    %595 = vmatpush1.msra.mxu0 0.0
    %596 = vmatprep.subr.mxu0 0.0
    %597 = vmatpush1.msra.mxu0 0.0
    %598 = vmatprep.subr.mxu0 0.0
    %599 = vmatpush1.msra.mxu0 0.0
    %600 = vmatprep.subr.mxu0 0.0
    %601 = vmatpush1.msra.mxu0 0.0
    %602 = vmatprep.subr.mxu0 0.0
    %603 = vmatpush1.msra.mxu0 0.0
    %604 = vmatprep.subr.mxu0 0.0
    %605 = vmatpush1.msra.mxu0 0.0
    %606 = vmatprep.subr.mxu0 0.0
    %607 = vmatpush1.msra.mxu0 0.0
    %608 = vmatprep.subr.mxu0 0.0
    %609 = vmatpush1.msra.mxu0 0.0
    %610 = vmatprep.subr.mxu0 0.0
    %611 = vmatpush1.msra.mxu0 0.0
    %612 = vmatprep.subr.mxu0 0.0
    %613 = vmatpush1.msra.mxu0 0.0
    %614 = vmatprep.subr.mxu0 0.0
    %615 = vmatpush1.msra.mxu0 %v553
    %616 = vmatprep.subr.mxu0 0.0
    %617 = vmatpush1.msra.mxu0 %v552
    %618 = vmatprep.subr.mxu0 0.0
    %619 = vmatpush1.msra.mxu0 %v551
    %620 = vmatprep.subr.mxu0 0.0
    %621 = vmatpush1.msra.mxu0 %v550
    %622 = vmatprep.subr.mxu0 0.0
    %623 = vmatpush1.msra.mxu0 %v549
    %624 = vmatprep.subr.mxu0 0.0
    %625 = vmatpush1.msra.mxu0 %v548
    %626 = vmatprep.subr.mxu0 0.0
    %627 = vmatpush2.msra.mxu0 0.0
    %628 = vmatprep.subr.mxu0 0.0
    %629 = vmatpush2.msra.mxu0 0.0
    %630 = vmatprep.subr.mxu0 0.0
    %631 = vmatpush2.msra.mxu0 0.0
    %632 = vmatprep.subr.mxu0 0.0
    %633 = vmatpush2.msra.mxu0 0.0
    %634 = vmatprep.subr.mxu0 0.0
    %635 = vmatpush2.msra.mxu0 0.0
    %636 = vmatprep.subr.mxu0 0.0
    %637 = vmatpush2.msra.mxu0 0.0
    %638 = vmatprep.subr.mxu0 0.0
    %639 = vmatpush2.msra.mxu0 0.0
    %640 = vmatprep.subr.mxu0 0.0
    %641 = vmatpush2.msra.mxu0 0.0
    %642 = vmatprep.subr.mxu0 0.0
    %643 = vmatpush2.msra.mxu0 0.0
    %644 = vmatprep.subr.mxu0 0.0
    %645 = vmatpush2.msra.mxu0 0.0
    %646 = vmatprep.subr.mxu0 0.0
    %647 = vmatpush2.msra.mxu0 0.0
    %648 = vmatprep.subr.mxu0 0.0
    %649 = vmatpush2.msra.mxu0 0.0
    %650 = vmatprep.subr.mxu0 0.0
    %651 = vmatpush2.msra.mxu0 0.0
    %652 = vmatprep.subr.mxu0 0.0
    %653 = vmatpush2.msra.mxu0 0.0
    %654 = vmatprep.subr.mxu0 0.0
    %655 = vmatpush2.msra.mxu0 0.0
    %656 = vmatprep.subr.mxu0 0.0
    %657 = vmatpush2.msra.mxu0 0.0
    %658 = vmatprep.mubr.f32.mxu0 0.0
    %659 = vmatmul.mubr.f32.gmra.mxu0 %v586
    %v660 = vpop.f32.mrf.mxu0
    %v661 = vadd.f32 %v559, %v660
    %v662 = vpop.f32.mrf.mxu0
    %663 = vmatprep.mubr.f32.mxu0 0.0
    %664 = vmatmul.mubr.f32.gmra.mxu0 %v588
    %v665 = vpop.f32.mrf.mxu0
    %v666 = vadd.f32 %v559, %v665
    %v667 = vpop.f32.mrf.mxu0
    %668 = vmatprep.mubr.f32.mxu0 0.0
    %669 = vmatmul.mubr.f32.gmra.mxu0 %v590
    %v670 = vpop.f32.mrf.mxu0
    %v671 = vadd.f32 %v559, %v670
    %v672 = vpop.f32.mrf.mxu0
    %673 = vmatprep.mubr.f32.mxu0 0.0
    %674 = vmatmul.mubr.f32.gmra.mxu0 %v592
    %v675 = vpop.f32.mrf.mxu0
    %v676 = vadd.f32 %v559, %v675
    %v677 = vpop.f32.mrf.mxu0
    %678 = vdwg.mxu0
    %v679 = vtanh.pop %v661
    %v680 = vtanh.pop %v666
    %v681 = vtanh.pop %v671
    %v682 = vtanh.pop %v676
    %v683 = vxor.u32 %v661, 2147483648
    %v684 = vxor.u32 %v666, 2147483648
    %v685 = vxor.u32 %v671, 2147483648
    %v686 = vxor.u32 %v676, 2147483648
    %v687 = vmul.f32 %v683, 1.442695
    %v688 = vpow.pop %v687
    %v689 = vmul.f32 %v684, 1.442695
    %v690 = vpow.pop %v689
    %v691 = vmul.f32 %v685, 1.442695
    %v692 = vpow.pop %v691
    %v693 = vmul.f32 %v686, 1.442695
    %v694 = vpow.pop %v693
    %v695 = vadd.f32 %v688, 1.0
    %v696 = vadd.f32 %v690, 1.0
    %v697 = vadd.f32 %v692, 1.0
    %v698 = vadd.f32 %v694, 1.0
    %v699 = vrcp.pop %v695
    %v700 = vmul.f32 1.0, %v699
    %v701 = vrcp.pop %v696
    %v702 = vmul.f32 1.0, %v701
    %v703 = vrcp.pop %v697
    %v704 = vmul.f32 1.0, %v703
    %v705 = vrcp.pop %v698
    %v706 = vmul.f32 1.0, %v705
    %711 = vrot.lane.b32.xlu0 %v700, 96
    %v712 = vpop.permute.xlu0 %711
    %713 = vrot.lane.b32.xlu0 %v702, 96
    %v714 = vpop.permute.xlu0 %713
    %715 = vrot.lane.b32.xlu0 %v704, 96
    %v716 = vpop.permute.xlu0 %715
    %717 = vrot.lane.b32.xlu0 %v706, 96
    %v718 = vpop.permute.xlu0 %717
    %v723 = vmul.f32 %v679, %v712
    %v724 = vmul.f32 %v680, %v714
    %v725 = vmul.f32 %v681, %v716
    %v726 = vmul.f32 %v682, %v718
    %731 = vrot.lane.b32.xlu0 %v544, 64
    %v732 = vpop.permute.xlu0 %731
    %733 = vrot.lane.b32.xlu0 %v545, 64
    %v734 = vpop.permute.xlu0 %733
    %735 = vrot.lane.b32.xlu0 %v546, 64
    %v736 = vpop.permute.xlu0 %735
    %737 = vrot.lane.b32.xlu0 %v547, 64
    %v738 = vpop.permute.xlu0 %737
    %747 = vrot.lane.b32.xlu0 %v723, 96
    %v748 = vpop.permute.xlu0 %747
    %749 = vrot.lane.b32.xlu0 %v724, 96
    %v750 = vpop.permute.xlu0 %749
    %751 = vrot.lane.b32.xlu0 %v725, 96
    %v752 = vpop.permute.xlu0 %751
    %753 = vrot.lane.b32.xlu0 %v726, 96
    %v754 = vpop.permute.xlu0 %753
    %v759 = vsel %vm93, %v373, %v732
    %v760 = vsel %vm93, %v375, %v734
    %v761 = vsel %vm93, %v377, %v736
    %v762 = vsel %vm93, %v379, %v738
    %v763 = vsel %vm360, %v759, %v748
    %v764 = vsel %vm360, %v760, %v750
    %v765 = vsel %vm360, %v761, %v752
    %v766 = vsel %vm360, %v762, %v754
    %v767 = vld [vmem:[%s7] sm:$0xff]
    %v768 = vld [vmem:[%s7 + $0x8] sm:$0xff]
    %v769 = vld [vmem:[%s7 + $0x10] sm:$0xff]
    %v770 = vld [vmem:[%s7 + $0x18] sm:$0xff]
    %v771 = vld [vmem:[%s7 + $0x20] sm:$0xff]
    %v772 = vld [vmem:[%s7 + $0x28] sm:$0xff]
    %v773 = vld [vmem:[%s7 + $0x30] sm:$0xff]
    %v774 = vld [vmem:[%s7 + $0x38] sm:$0xff]
    %v775 = vld [vmem:[%s7 + $0x40] sm:$0xff]
    %v776 = vld [vmem:[%s7 + $0x48] sm:$0xff]
    %v777 = vld [vmem:[%s7 + $0x50] sm:$0xff]
    %v778 = vld [vmem:[%s7 + $0x58] sm:$0xff]
    %v779 = vld [vmem:[%s7 + $0x60] sm:$0xff]
    %v780 = vld [vmem:[%s7 + $0x68] sm:$0xff]
    %v781 = vld [vmem:[%s7 + $0x70] sm:$0xff]
    %v782 = vld [vmem:[%s7 + $0x78] sm:$0xff]
    %v783 = vld [vmem:[#allocation2] sm:$0x1]
    %v785 = vlaneseq
    %v786 = vshrl.u32 %v785, 7
    %v787 = vsub.s32 0, %v786
    %v788 = vrot.slane %v783, %v787
    %790 = vmatprep.subr.mxu0 0.0
    %791 = vmatpush1.msra.mxu0 %v782
    %792 = vmatprep.subr.mxu0 0.0
    %793 = vmatpush1.msra.mxu0 %v781
    %794 = vmatprep.subr.mxu0 0.0
    %795 = vmatpush1.msra.mxu0 %v780
    %796 = vmatprep.subr.mxu0 0.0
    %797 = vmatpush1.msra.mxu0 %v779
    %798 = vmatprep.subr.mxu0 0.0
    %799 = vmatpush1.msra.mxu0 %v778
    %800 = vmatprep.subr.mxu0 0.0
    %801 = vmatpush1.msra.mxu0 %v777
    %802 = vmatprep.subr.mxu0 0.0
    %803 = vmatpush1.msra.mxu0 %v776
    %804 = vmatprep.subr.mxu0 0.0
    %805 = vmatpush1.msra.mxu0 %v775
    %806 = vmatprep.subr.mxu0 0.0
    %807 = vmatpush1.msra.mxu0 %v774
    %808 = vmatprep.subr.mxu0 0.0
    %809 = vmatpush1.msra.mxu0 %v773
    %810 = vmatprep.subr.mxu0 0.0
    %811 = vmatpush1.msra.mxu0 %v772
    %812 = vmatprep.subr.mxu0 0.0
    %813 = vmatpush1.msra.mxu0 %v771
    %814 = vmatprep.subr.mxu0 0.0
    %815 = vmatpush1.msra.mxu0 %v770
    %816 = vmatprep.subr.mxu0 0.0
    %817 = vmatpush1.msra.mxu0 %v769
    %818 = vmatprep.subr.mxu0 0.0
    %819 = vmatpush1.msra.mxu0 %v768
    %820 = vmatprep.subr.mxu0 0.0
    %821 = vmatpush1.msra.mxu0 %v767
    %822 = vmatprep.subr.mxu0 0.0
    %823 = vmatpush2.msra.mxu0 0.0
    %824 = vmatprep.subr.mxu0 0.0
    %825 = vmatpush2.msra.mxu0 0.0
    %826 = vmatprep.subr.mxu0 0.0
    %827 = vmatpush2.msra.mxu0 0.0
    %828 = vmatprep.subr.mxu0 0.0
    %829 = vmatpush2.msra.mxu0 0.0
    %830 = vmatprep.subr.mxu0 0.0
    %831 = vmatpush2.msra.mxu0 0.0
    %832 = vmatprep.subr.mxu0 0.0
    %833 = vmatpush2.msra.mxu0 0.0
    %834 = vmatprep.subr.mxu0 0.0
    %835 = vmatpush2.msra.mxu0 0.0
    %836 = vmatprep.subr.mxu0 0.0
    %837 = vmatpush2.msra.mxu0 0.0
    %838 = vmatprep.subr.mxu0 0.0
    %839 = vmatpush2.msra.mxu0 0.0
    %840 = vmatprep.subr.mxu0 0.0
    %841 = vmatpush2.msra.mxu0 0.0
    %842 = vmatprep.subr.mxu0 0.0
    %843 = vmatpush2.msra.mxu0 0.0
    %844 = vmatprep.subr.mxu0 0.0
    %845 = vmatpush2.msra.mxu0 0.0
    %846 = vmatprep.subr.mxu0 0.0
    %847 = vmatpush2.msra.mxu0 0.0
    %848 = vmatprep.subr.mxu0 0.0
    %849 = vmatpush2.msra.mxu0 0.0
    %850 = vmatprep.subr.mxu0 0.0
    %851 = vmatpush2.msra.mxu0 0.0
    %852 = vmatprep.subr.mxu0 0.0
    %853 = vmatpush2.msra.mxu0 0.0
    %854 = vmatprep.mubr.f32.mxu0 0.0
    %855 = vmatmul.mubr.f32.gmra.mxu0 %v763
    %v856 = vpop.f32.mrf.mxu0
    %v857 = vadd.f32 %v788, %v856
    %v858 = vpop.f32.mrf.mxu0
    %859 = vmatprep.mubr.f32.mxu0 0.0
    %860 = vmatmul.mubr.f32.gmra.mxu0 %v764
    %v861 = vpop.f32.mrf.mxu0
    %v862 = vadd.f32 %v788, %v861
    %v863 = vpop.f32.mrf.mxu0
    %864 = vmatprep.mubr.f32.mxu0 0.0
    %865 = vmatmul.mubr.f32.gmra.mxu0 %v765
    %v866 = vpop.f32.mrf.mxu0
    %v867 = vadd.f32 %v788, %v866
    %v868 = vpop.f32.mrf.mxu0
    %869 = vmatprep.mubr.f32.mxu0 0.0
    %870 = vmatmul.mubr.f32.gmra.mxu0 %v766
    %v871 = vpop.f32.mrf.mxu0
    %v872 = vadd.f32 %v788, %v871
    %v873 = vpop.f32.mrf.mxu0
    %874 = vdwg.mxu0
    %vm875 = vcmask 7168
    %876 = vst.msk [vmem:[%s9] sm:$0xff] %vm875, %v857
    %877 = vst.msk [vmem:[%s9 + $0x8] sm:$0xff] %vm875, %v862
    %878 = vst.msk [vmem:[%s9 + $0x10] sm:$0xff] %vm875, %v867
    %879 = vst.msk [vmem:[%s9 + $0x18] sm:$0xff] %vm875, %v872
    // Predicated region
    $region42: #{tpu_custom_call.1} parent=1 // pred_check
      _
    $region43: #{tpu_custom_call.1} parent=1 // pred_check_branch
      %881 = sbr.rel (0) target = $region45
    $region44: #{tpu_custom_call.1} parent=1 // pred_region
      _
    $region45: #{tpu_custom_call.1} parent=1 // pred_fallthru
      _
    // Predicated region
    $region46: #{tpu_custom_call.1} parent=1 // pred_check
      _
    $region47: #{tpu_custom_call.1} parent=1 // pred_check_branch
      %883 = sbr.rel (0) target = $region49
    $region48: #{tpu_custom_call.1} parent=1 // pred_region
      _
    $region49: #{tpu_custom_call.1} parent=1 // pred_fallthru
      _
    %884 = vsyncpa [#allocation4], 1

</llo_original>
